<compile_context>
chip_gen: v6e
topology: v6e:2x2x1
jax: 0.10.0
libtpu: 0.0.40
codegen_flags: <defaults>
</compile_context>

<pallas_src>
import functools

import jax
import jax.numpy as jnp
import numpy as np
from jax.experimental import pallas as pl
from jax.experimental.pallas import tpu as pltpu


def _round_up(x, m):
    return (x + m - 1) // m * m


# ----------------------------- Pallas kernel ---------------------------------
def wide_deep_kernel(feat_ref, w1_ref, w2_ref, w3_ref, col_ref, scal_ref, out_ref,
                     *, deep_pad, wide_pad, h1, h2, h3):
    """One batch tile, features-major layout (batch on lanes).

    feat_ref : (deep_pad + wide_pad, TB) f32   activation slab for this tile
    w1_ref   : (h1, deep_pad) f32   w2_ref: (h2, h1) f32   w3_ref: (h3, h2) f32
    col_ref  : (h1+h2+h3+h3+wide_pad, 1) f32   packed [b1; b2; b3; W4; wide_W]
    scal_ref : (3,) f32 in SMEM                [b4, wide_b, mix]
    out_ref  : (1, TB) f32                     batch on lanes => dense stores
    """
    deep = feat_ref[0:deep_pad, :]                         # (deep_pad, TB)
    wide = feat_ref[deep_pad:deep_pad + wide_pad, :]       # (wide_pad, TB)

    o1 = h1
    o2 = o1 + h2
    o3 = o2 + h3
    o4 = o3 + h3
    b1 = col_ref[0:o1, :]                                  # (h1, 1)
    b2 = col_ref[o1:o2, :]                                 # (h2, 1)
    b3 = col_ref[o2:o3, :]                                 # (h3, 1)
    w4 = col_ref[o3:o4, :]                                 # (h3, 1)
    ww = col_ref[o4:o4 + wide_pad, :]                      # (wide_pad, 1)

    h = jnp.maximum(
        jnp.dot(w1_ref[...], deep, preferred_element_type=jnp.float32) + b1, 0.0)
    h = jnp.maximum(
        jnp.dot(w2_ref[...], h, preferred_element_type=jnp.float32) + b2, 0.0)
    h = jnp.maximum(
        jnp.dot(w3_ref[...], h, preferred_element_type=jnp.float32) + b3, 0.0)

    # N=1 heads: VPU multiply + sublane (XLU) reduce instead of N=1 MXU passes.
    deep_y = jnp.maximum(jnp.sum(h * w4, axis=0, keepdims=True) + scal_ref[0], 0.0)
    wide_y = jnp.sum(wide * ww, axis=0, keepdims=True) + scal_ref[1]

    mix = scal_ref[2]
    out_ref[...] = jax.nn.sigmoid(mix * wide_y + (1.0 - mix) * deep_y)


# ------------------------------ Wrapper ---------------------------------------
@functools.partial(jax.jit, static_argnames=("n_cat", "tb"))
def wide_deep_forward(wide_x, deep_x, params, *, n_cat, tb=2048):
    """Reproduces Wide_Deep.forward(wide_x, deep_x)."""
    B = wide_x.shape[0]
    WIDE_DIM = wide_x.shape[1]
    DEEP_DIM = params["W1"].shape[0]
    H1 = params["W1"].shape[1]
    H2 = params["W2"].shape[1]
    H3 = params["W3"].shape[1]

    DEEP_PAD = _round_up(DEEP_DIM, 8)
    WIDE_PAD = _round_up(WIDE_DIM, 8)
    F_TOT = DEEP_PAD + WIDE_PAD
    CP = H1 + H2 + H3 + H3 + WIDE_PAD

    # ---- batch-tile selection (lane dim): lane-dense tiles, grid >= 2 when possible
    padded128 = _round_up(B, 128)
    if padded128 <= 128:
        TB = 128                                           # tiny batch: one full tile
    else:
        TB = min(tb, max(128, (padded128 // 2) // 128 * 128))   # >=2 steps for megacore
    padded_B = _round_up(B, TB)
    grid = padded_B // TB

    # ---- glue: build the features-major activation slab directly ------------
    f32 = jnp.float32
    cat_idx = deep_x[:, :n_cat].astype(jnp.int32)          # (B, n_cat)
    cont = deep_x[:, n_cat:]                               # (B, cont_dim)
    parts = [cont.T.astype(f32)]
    for i in range(n_cat):
        parts.append(jnp.take(params["emb"][i], cat_idx[:, i], axis=0).T.astype(f32))
    if DEEP_PAD > DEEP_DIM:
        parts.append(jnp.zeros((DEEP_PAD - DEEP_DIM, B), f32))
    parts.append(wide_x.T.astype(f32))
    if WIDE_PAD > WIDE_DIM:
        parts.append(jnp.zeros((WIDE_PAD - WIDE_DIM, B), f32))
    slab = jnp.concatenate(parts, axis=0)                  # (F_TOT, B)
    slab = jnp.pad(slab, ((0, 0), (0, padded_B - B)))      # (F_TOT, padded_B)

    # ---- weight / bias packing (VMEM-resident across grid steps) ------------
    w1t = jnp.pad(params["W1"].T.astype(f32),
                  ((0, 0), (0, DEEP_PAD - DEEP_DIM)))      # (H1, DEEP_PAD)
    w2t = params["W2"].T.astype(f32)                       # (H2, H1)
    w3t = params["W3"].T.astype(f32)                       # (H3, H2)
    colpack = jnp.concatenate([
        params["b1"].reshape(H1, 1).astype(f32),
        params["b2"].reshape(H2, 1).astype(f32),
        params["b3"].reshape(H3, 1).astype(f32),
        params["W4"].reshape(H3, 1).astype(f32),
        jnp.pad(params["wide_W"].reshape(WIDE_DIM, 1).astype(f32),
                ((0, WIDE_PAD - WIDE_DIM), (0, 0))),
    ], axis=0)                                             # (CP, 1)
    scal = jnp.stack([params["b4"][0, 0], params["wide_b"][0, 0],
                      params["mix"][0, 0]]).astype(f32)    # (3,) -> SMEM

    kernel = functools.partial(
        wide_deep_kernel,
        deep_pad=DEEP_PAD, wide_pad=WIDE_PAD, h1=H1, h2=H2, h3=H3)

    in_specs = [
        pl.BlockSpec((F_TOT, TB), lambda i: (0, i)),           # activation slab (tiled)
        pl.BlockSpec((H1, DEEP_PAD), lambda i: (0, 0)),        # W1 (resident)
        pl.BlockSpec((H2, H1), lambda i: (0, 0)),              # W2 (resident)
        pl.BlockSpec((H3, H2), lambda i: (0, 0)),              # W3 (resident)
        pl.BlockSpec((CP, 1), lambda i: (0, 0)),               # packed columns (resident)
        pl.BlockSpec(memory_space=pltpu.MemorySpace.SMEM),     # packed scalars
    ]

    flops = 2 * padded_B * (DEEP_PAD * H1 + H1 * H2 + H2 * H3 + H3 + WIDE_PAD)
    bytes_accessed = 4 * (padded_B * (F_TOT + 1)
                          + H1 * DEEP_PAD + H2 * H1 + H3 * H2 + CP + 3)
    cost = pl.CostEstimate(flops=int(flops), transcendentals=int(padded_B),
                           bytes_accessed=int(bytes_accessed))

    out_t = pl.pallas_call(
        kernel,
        out_shape=jax.ShapeDtypeStruct((1, padded_B), jnp.float32),
        grid=(grid,),
        in_specs=in_specs,
        out_specs=pl.BlockSpec((1, TB), lambda i: (0, i)),
        compiler_params=pltpu.CompilerParams(
            dimension_semantics=("parallel",)),
        cost_estimate=cost,
    )(slab, w1t, w2t, w3t, colpack, scal)

    return out_t[:, :B].T                                   # (B, 1)


# ---------------------------- Reference (plain JAX, f32) -----------------------
def wide_deep_reference(wide_x, deep_x, params, n_cat):
    cat_idx = deep_x[:, :n_cat].astype(jnp.int32)
    cont = deep_x[:, n_cat:]
    pre_embed = jnp.concatenate(
        [params["emb"][i][cat_idx[:, i]] for i in range(n_cat)], axis=1)
    h = jnp.concatenate([cont, pre_embed], axis=1)
    wide_y = wide_x @ params["wide_W"] + params["wide_b"]
    h = jax.nn.relu(h @ params["W1"] + params["b1"])
    h = jax.nn.relu(h @ params["W2"] + params["b2"])
    h = jax.nn.relu(h @ params["W3"] + params["b3"])
    deep_y = jax.nn.relu(h @ params["W4"] + params["b4"])
    w = params["mix"][0, 0]
    return jax.nn.sigmoid(w * wide_y + (1.0 - w) * deep_y)


# ------------------------------- Main ------------------------------------------
if __name__ == "__main__":
    # small, deterministic config
    wide_dim = 10                # len(wide_cols)
    cat_cards = [5, 7, 9]        # cardinality of each categorical encoder
    n_cat = len(cat_cards)
    embed_dim = 4                # config.embed_dim
    cont_dim = 6                 # len(cont_cols)
    deep_dim = cont_dim + n_cat * embed_dim   # input dim of deep_Linear1

    key = jax.random.PRNGKey(0)
    keys = jax.random.split(key, 20)

    def init(k, shape, scale=0.1):
        return (scale * jax.random.normal(k, shape)).astype(jnp.float32)

    params = {
        "emb": [init(keys[i], (cat_cards[i], embed_dim)) for i in range(n_cat)],
        "wide_W": init(keys[3], (wide_dim, 1)),
        "wide_b": init(keys[4], (1, 1)),
        "W1": init(keys[5], (deep_dim, 256)),
        "b1": init(keys[6], (1, 256)),
        "W2": init(keys[7], (256, 128)),
        "b2": init(keys[8], (1, 128)),
        "W3": init(keys[9], (128, 64)),
        "b3": init(keys[10], (1, 64)),
        "W4": init(keys[11], (64, 1)),
        "b4": init(keys[12], (1, 1)),
        "mix": jnp.array([[0.5]], dtype=jnp.float32),   # nn.Parameter([0.5])
    }

    def make_inputs(kw, kc, kn, B):
        wide_x = jax.random.normal(kw, (B, wide_dim)).astype(jnp.float32)
        cat_part = jnp.stack(
            [jax.random.randint(jax.random.fold_in(kc, i), (B,), 0, cat_cards[i])
             for i in range(n_cat)], axis=1).astype(jnp.float32)
        cont_part = jax.random.normal(kn, (B, cont_dim)).astype(jnp.float32)
        deep_x = jnp.concatenate([cat_part, cont_part], axis=1)
        return wide_x, deep_x

    # --- check 1: tiny batch (single 128-lane tile) -----------------------------
    B1 = 8
    wide_x, deep_x = make_inputs(keys[13], keys[14], keys[15], B1)
    out = jax.block_until_ready(wide_deep_forward(wide_x, deep_x, params, n_cat=n_cat))
    ref = jax.block_until_ready(wide_deep_reference(wide_x, deep_x, params, n_cat))
    assert out.shape == (B1, 1)
    np.testing.assert_allclose(np.asarray(out), np.asarray(ref), rtol=1e-3, atol=1e-3)

    # --- check 2: multi-tile grid (grid=3, exercises pipelining / resident weights)
    B2 = 300
    wide_x2, deep_x2 = make_inputs(keys[16], keys[17], keys[18], B2)
    out2 = jax.block_until_ready(
        wide_deep_forward(wide_x2, deep_x2, params, n_cat=n_cat))
    ref2 = jax.block_until_ready(wide_deep_reference(wide_x2, deep_x2, params, n_cat))
    assert out2.shape == (B2, 1)
    np.testing.assert_allclose(np.asarray(out2), np.asarray(ref2), rtol=1e-3, atol=1e-3)

    print("KERNEL_OK")
</pallas_src>

<mosaic_0001>
module attributes {stable_mosaic.version = 11 : i64} {
  func.func @wide_deep_kernel(%arg0: i32, %arg1: memref<40x128xf32, #tpu.memory_space<vmem>>, %arg2: memref<256x24xf32, #tpu.memory_space<vmem>>, %arg3: memref<128x256xf32, #tpu.memory_space<vmem>>, %arg4: memref<64x128xf32, #tpu.memory_space<vmem>>, %arg5: memref<528x1xf32, #tpu.memory_space<vmem>>, %arg6: memref<3xf32, #tpu.memory_space<smem>>, %arg7: memref<1x128xf32, #tpu.memory_space<vmem>>) attributes {dimension_semantics = [#tpu.dimension_semantics<parallel>], iteration_bounds = array<i64: 1>, scalar_prefetch = 0 : i64, scratch_operands = 0 : i64, tpu.core_type = #tpu.core_type<tc>, window_params = [{transform_indices = @transform_0, window_bounds = array<i64: 40, 128>}, {pipeline_mode = #tpu.pipeline_mode<synchronous>, transform_indices = @transform_1, window_bounds = array<i64: 256, 24>}, {pipeline_mode = #tpu.pipeline_mode<synchronous>, transform_indices = @transform_2, window_bounds = array<i64: 128, 256>}, {pipeline_mode = #tpu.pipeline_mode<synchronous>, transform_indices = @transform_3, window_bounds = array<i64: 64, 128>}, {pipeline_mode = #tpu.pipeline_mode<synchronous>, transform_indices = @transform_4, window_bounds = array<i64: 528, 1>}, {transform_indices = @transform_5, window_bounds = array<i64: 3>}, {transform_indices = @transform_6, window_bounds = array<i64: 1, 128>}]} {
    %c0 = arith.constant 0 : index
    %c0_0 = arith.constant 0 : index
    %0 = vector.load %arg1[%c0, %c0_0] : memref<40x128xf32, #tpu.memory_space<vmem>>, vector<24x128xf32>
    %c24 = arith.constant 24 : index
    %c0_1 = arith.constant 0 : index
    %1 = vector.load %arg1[%c24, %c0_1] : memref<40x128xf32, #tpu.memory_space<vmem>>, vector<16x128xf32>
    %c0_2 = arith.constant 0 : index
    %c0_3 = arith.constant 0 : index
    %2 = vector.load %arg5[%c0_2, %c0_3] : memref<528x1xf32, #tpu.memory_space<vmem>>, vector<256x1xf32>
    %c256 = arith.constant 256 : index
    %c0_4 = arith.constant 0 : index
    %3 = vector.load %arg5[%c256, %c0_4] : memref<528x1xf32, #tpu.memory_space<vmem>>, vector<128x1xf32>
    %c384 = arith.constant 384 : index
    %c0_5 = arith.constant 0 : index
    %4 = vector.load %arg5[%c384, %c0_5] : memref<528x1xf32, #tpu.memory_space<vmem>>, vector<64x1xf32>
    %c448 = arith.constant 448 : index
    %c0_6 = arith.constant 0 : index
    %5 = vector.load %arg5[%c448, %c0_6] : memref<528x1xf32, #tpu.memory_space<vmem>>, vector<64x1xf32>
    %c512 = arith.constant 512 : index
    %c0_7 = arith.constant 0 : index
    %6 = vector.load %arg5[%c512, %c0_7] : memref<528x1xf32, #tpu.memory_space<vmem>>, vector<16x1xf32>
    %c0_8 = arith.constant 0 : index
    %c0_9 = arith.constant 0 : index
    %7 = vector.load %arg2[%c0_8, %c0_9] : memref<256x24xf32, #tpu.memory_space<vmem>>, vector<256x24xf32>
    %cst = arith.constant dense<0.000000e+00> : vector<256x128xf32>
    %8 = tpu.matmul %7, %0, %cst {dimension_numbers = #tpu.dot_dimension_numbers<[1], [0], [0], [1], [0, 0, 1, 1], [], []>} : vector<256x24xf32>, vector<24x128xf32>, vector<256x128xf32> -> vector<256x128xf32>
    %9 = vector.broadcast %2 : vector<256x1xf32> to vector<256x128xf32>
    %10 = arith.addf %8, %9 : vector<256x128xf32>
    %cst_10 = arith.constant 0.000000e+00 : f32
    %11 = vector.broadcast %cst_10 : f32 to vector<256x128xf32>
    %12 = arith.maximumf %10, %11 : vector<256x128xf32>
    %c0_11 = arith.constant 0 : index
    %c0_12 = arith.constant 0 : index
    %13 = vector.load %arg3[%c0_11, %c0_12] : memref<128x256xf32, #tpu.memory_space<vmem>>, vector<128x256xf32>
    %cst_13 = arith.constant dense<0.000000e+00> : vector<128x128xf32>
    %14 = tpu.matmul %13, %12, %cst_13 {dimension_numbers = #tpu.dot_dimension_numbers<[1], [0], [0], [1], [0, 0, 1, 1], [], []>} : vector<128x256xf32>, vector<256x128xf32>, vector<128x128xf32> -> vector<128x128xf32>
    %15 = vector.broadcast %3 : vector<128x1xf32> to vector<128x128xf32>
    %16 = arith.addf %14, %15 : vector<128x128xf32>
    %cst_14 = arith.constant 0.000000e+00 : f32
    %17 = vector.broadcast %cst_14 : f32 to vector<128x128xf32>
    %18 = arith.maximumf %16, %17 : vector<128x128xf32>
    %c0_15 = arith.constant 0 : index
    %c0_16 = arith.constant 0 : index
    %19 = vector.load %arg4[%c0_15, %c0_16] : memref<64x128xf32, #tpu.memory_space<vmem>>, vector<64x128xf32>
    %cst_17 = arith.constant dense<0.000000e+00> : vector<64x128xf32>
    %20 = tpu.matmul %19, %18, %cst_17 {dimension_numbers = #tpu.dot_dimension_numbers<[1], [0], [0], [1], [0, 0, 1, 1], [], []>} : vector<64x128xf32>, vector<128x128xf32>, vector<64x128xf32> -> vector<64x128xf32>
    %21 = vector.broadcast %4 : vector<64x1xf32> to vector<64x128xf32>
    %22 = arith.addf %20, %21 : vector<64x128xf32>
    %cst_18 = arith.constant 0.000000e+00 : f32
    %23 = vector.broadcast %cst_18 : f32 to vector<64x128xf32>
    %24 = arith.maximumf %22, %23 : vector<64x128xf32>
    %25 = vector.broadcast %5 : vector<64x1xf32> to vector<64x128xf32>
    %26 = arith.mulf %24, %25 : vector<64x128xf32>
    %cst_19 = arith.constant dense<0.000000e+00> : vector<128xf32>
    %27 = vector.multi_reduction <add>, %26, %cst_19 [0] : vector<64x128xf32> to vector<128xf32>
    %28 = vector.shape_cast %27 : vector<128xf32> to vector<1x128xf32>
    %c0_20 = arith.constant 0 : index
    %29 = memref.load %arg6[%c0_20] : memref<3xf32, #tpu.memory_space<smem>>
    %30 = vector.broadcast %29 : f32 to vector<1x128xf32>
    %31 = arith.addf %28, %30 : vector<1x128xf32>
    %cst_21 = arith.constant 0.000000e+00 : f32
    %32 = vector.broadcast %cst_21 : f32 to vector<1x128xf32>
    %33 = arith.maximumf %31, %32 : vector<1x128xf32>
    %34 = vector.broadcast %6 : vector<16x1xf32> to vector<16x128xf32>
    %35 = arith.mulf %1, %34 : vector<16x128xf32>
    %cst_22 = arith.constant dense<0.000000e+00> : vector<128xf32>
    %36 = vector.multi_reduction <add>, %35, %cst_22 [0] : vector<16x128xf32> to vector<128xf32>
    %37 = vector.shape_cast %36 : vector<128xf32> to vector<1x128xf32>
    %c1 = arith.constant 1 : index
    %38 = memref.load %arg6[%c1] : memref<3xf32, #tpu.memory_space<smem>>
    %39 = vector.broadcast %38 : f32 to vector<1x128xf32>
    %40 = arith.addf %37, %39 : vector<1x128xf32>
    %c2 = arith.constant 2 : index
    %41 = memref.load %arg6[%c2] : memref<3xf32, #tpu.memory_space<smem>>
    %42 = vector.broadcast %41 : f32 to vector<1x128xf32>
    %43 = arith.mulf %42, %40 : vector<1x128xf32>
    %cst_23 = arith.constant 1.000000e+00 : f32
    %44 = arith.subf %cst_23, %41 : f32
    %45 = vector.broadcast %44 : f32 to vector<1x128xf32>
    %46 = arith.mulf %45, %33 : vector<1x128xf32>
    %47 = arith.addf %43, %46 : vector<1x128xf32>
    %48 = arith.negf %47 : vector<1x128xf32>
    %49 = math.exp %48 : vector<1x128xf32>
    %cst_24 = arith.constant 1.000000e+00 : f32
    %50 = vector.broadcast %cst_24 : f32 to vector<1x128xf32>
    %51 = arith.addf %50, %49 : vector<1x128xf32>
    %52 = arith.divf %50, %51 : vector<1x128xf32>
    %c0_25 = arith.constant 0 : index
    %c0_26 = arith.constant 0 : index
    %53 = vector.load %arg7[%c0_25, %c0_26] : memref<1x128xf32, #tpu.memory_space<vmem>>, vector<1x128xf32>
    tpu.vector_store %arg7[%c0_25, %c0_26], %52 {strides = array<i32>} : memref<1x128xf32, #tpu.memory_space<vmem>>, vector<1x128xf32>,
    return
  }
  func.func @transform_0(%arg0: i32) -> (i32, i32) {
    %c0_i32 = arith.constant 0 : i32
    %c0_i32_0 = arith.constant 0 : i32
    return %c0_i32, %arg0 : i32, i32
  }
  func.func @transform_1(%arg0: i32) -> (i32, i32) {
    %c0_i32 = arith.constant 0 : i32
    %c0_i32_0 = arith.constant 0 : i32
    %c0_i32_1 = arith.constant 0 : i32
    return %c0_i32, %c0_i32_0 : i32, i32
  }
  func.func @transform_2(%arg0: i32) -> (i32, i32) {
    %c0_i32 = arith.constant 0 : i32
    %c0_i32_0 = arith.constant 0 : i32
    %c0_i32_1 = arith.constant 0 : i32
    return %c0_i32, %c0_i32_0 : i32, i32
  }
  func.func @transform_3(%arg0: i32) -> (i32, i32) {
    %c0_i32 = arith.constant 0 : i32
    %c0_i32_0 = arith.constant 0 : i32
    %c0_i32_1 = arith.constant 0 : i32
    return %c0_i32, %c0_i32_0 : i32, i32
  }
  func.func @transform_4(%arg0: i32) -> (i32, i32) {
    %c0_i32 = arith.constant 0 : i32
    %c0_i32_0 = arith.constant 0 : i32
    %c0_i32_1 = arith.constant 0 : i32
    return %c0_i32, %c0_i32_0 : i32, i32
  }
  func.func @transform_5(%arg0: i32) -> i32 {
    %c0_i32 = arith.constant 0 : i32
    %c0_i32_0 = arith.constant 0 : i32
    return %c0_i32 : i32
  }
  func.func @transform_6(%arg0: i32) -> (i32, i32) {
    %c0_i32 = arith.constant 0 : i32
    %c0_i32_0 = arith.constant 0 : i32
    return %c0_i32, %arg0 : i32, i32
  }
}

</mosaic_0001>

<llo_original>
// kernel: wide_deep_forward.1
$region0: #{wide_deep_forward.1}
  #allocation0 [shape = 'u32[]', space=smem, size = 0x4, offset = 0x4, fixed_abs, tag = 'smem constant byte address 0x4 - core index']
  #allocation1 [shape = 'u32[144,128]{1,0:T(1,128)}', space=vmem, size = 0x12000, scoped, tag = 'internal scratch']
  %s0 = inlined_call_operand.vmem [shape: f32[40,128], index: 0, kind: input, shape index: {}]
  %s1 = inlined_call_operand.vmem [shape: f32[256,24], index: 1, kind: input, shape index: {}]
  %s2 = inlined_call_operand.vmem [shape: f32[128,256], index: 2, kind: input, shape index: {}]
  %s3 = inlined_call_operand.vmem [shape: f32[64,128], index: 3, kind: input, shape index: {}]
  %s4 = inlined_call_operand.vmem [shape: f32[528,1], index: 4, kind: input, shape index: {}]
  %s5 = inlined_call_operand.vmem [shape: f32[3], index: 5, kind: input, shape index: {}]
  %s6 = inlined_call_operand.vmem [shape: f32[1,128], index: 6, kind: output, shape index: {}]
  %s7 = sld [smem:[#allocation0]]
  $region38: #{wide_deep_forward.1} parent=0
    _
  %s9 = ssub.s32 1, %s7
  %s10 = scalar_select 0, %s9, %s7
  $region1: #{wide_deep_forward.1} parent=0
    #allocation2 [shape = 'u8[512]{0}', space=smem, size = 0x200, scoped, tag = 'input window, operand 5, single buffered']
    #allocation3 [shape = 's32[1]{0}', space=sflag, size = 0x4, scoped, tag = 'scoped memory for wide_deep_forward.1']
    %11 = vsyncpa [#allocation3], 0
    // Predicated region
    $region2: #{wide_deep_forward.1} parent=1 // pred_check
      _
    $region3: #{wide_deep_forward.1} parent=1 // pred_check_branch
      %13 = sbr.rel (0) target = $region5
    $region4: #{wide_deep_forward.1} parent=1 // pred_region
      _
    $region5: #{wide_deep_forward.1} parent=1 // pred_fallthru
      _
    // Predicated region
    $region6: #{wide_deep_forward.1} parent=1 // pred_check
      _
    $region7: #{wide_deep_forward.1} parent=1 // pred_check_branch
      %15 = sbr.rel (0) target = $region9
    $region8: #{wide_deep_forward.1} parent=1 // pred_region
      _
    $region9: #{wide_deep_forward.1} parent=1 // pred_fallthru
      _
    // Predicated region
    $region10: #{wide_deep_forward.1} parent=1 // pred_check
      _
    $region11: #{wide_deep_forward.1} parent=1 // pred_check_branch
      %17 = sbr.rel (0) target = $region13
    $region12: #{wide_deep_forward.1} parent=1 // pred_region
      _
    $region13: #{wide_deep_forward.1} parent=1 // pred_fallthru
      _
    // Predicated region
    $region14: #{wide_deep_forward.1} parent=1 // pred_check
      _
    $region15: #{wide_deep_forward.1} parent=1 // pred_check_branch
      %19 = sbr.rel (0) target = $region17
    $region16: #{wide_deep_forward.1} parent=1 // pred_region
      _
    $region17: #{wide_deep_forward.1} parent=1 // pred_fallthru
      _
    // Predicated region
    $region18: #{wide_deep_forward.1} parent=1 // pred_check
      _
    $region19: #{wide_deep_forward.1} parent=1 // pred_check_branch
      %21 = sbr.rel (0) target = $region21
    $region20: #{wide_deep_forward.1} parent=1 // pred_region
      _
    $region21: #{wide_deep_forward.1} parent=1 // pred_fallthru
      _
    // Predicated region
    $region22: #{wide_deep_forward.1} parent=1 // pred_check
      _
    $region23: #{wide_deep_forward.1} parent=1 // pred_check_branch
      %23 = sbr.rel (0) target = $region25
    $region24: #{wide_deep_forward.1} parent=1 // pred_region
      %s25 = ssub.s32 16, 16
      %26 = vsyncadd [#allocation3], %s25
      %s28 = sshll.u32 %s5, 4
      %s29 = int_to_ptr.vmem [resolvable:$true] %s28
      %31 = dma.vmem_to_smem %s29, 16, [#allocation2], [#allocation3]
    $region25: #{wide_deep_forward.1} parent=1 // pred_fallthru
      _
    // Predicated region
    $region26: #{wide_deep_forward.1} parent=1 // pred_check
      _
    $region27: #{wide_deep_forward.1} parent=1 // pred_check_branch
      %33 = sbr.rel (0) target = $region29
    $region28: #{wide_deep_forward.1} parent=1 // pred_region
      %34 = dma.done [#allocation3], 16
    $region29: #{wide_deep_forward.1} parent=1 // pred_fallthru
      _
    %35 = sfence
    %v36 = vld [vmem:[%s0] sm:$0xff]
    %v37 = vld [vmem:[%s0 + $0x8] sm:$0xff]
    %v38 = vld [vmem:[%s0 + $0x10] sm:$0xff]
    %v39 = vld [vmem:[%s0 + $0x18] sm:$0xff]
    %v40 = vld [vmem:[%s0 + $0x20] sm:$0xff]
    %v41 = vld [vmem:[%s4] sm:$0xff]
    %v42 = vld [vmem:[%s4 + $0x8] sm:$0xff]
    %v43 = vld [vmem:[%s4 + $0x10] sm:$0xff]
    %v44 = vld [vmem:[%s4 + $0x18] sm:$0xff]
    %v45 = vld [vmem:[%s4 + $0x20] sm:$0xff]
    %v46 = vld [vmem:[%s4 + $0x28] sm:$0xff]
    %v47 = vld [vmem:[%s4 + $0x30] sm:$0xff]
    %v48 = vld [vmem:[%s4 + $0x38] sm:$0xff]
    %v49 = vld [vmem:[%s4 + $0x40] sm:$0xff]
    %v50 = vld [vmem:[%s4 + $0x48] sm:$0xff]
    %v51 = vld [vmem:[%s4 + $0x50] sm:$0xff]
    %v52 = vld [vmem:[%s4 + $0x58] sm:$0xff]
    %v53 = vld [vmem:[%s4 + $0x60] sm:$0xff]
    %v54 = vld [vmem:[%s4 + $0x68] sm:$0xff]
    %v55 = vld [vmem:[%s4 + $0x70] sm:$0xff]
    %v56 = vld [vmem:[%s4 + $0x78] sm:$0xff]
    %v57 = vld [vmem:[%s4 + $0x80] sm:$0xff]
    %v58 = vld [vmem:[%s4 + $0x88] sm:$0xff]
    %v59 = vld [vmem:[%s4 + $0x90] sm:$0xff]
    %v60 = vld [vmem:[%s4 + $0x98] sm:$0xff]
    %v61 = vld [vmem:[%s4 + $0xa0] sm:$0xff]
    %v62 = vld [vmem:[%s4 + $0xa8] sm:$0xff]
    %v63 = vld [vmem:[%s4 + $0xb0] sm:$0xff]
    %v64 = vld [vmem:[%s4 + $0xb8] sm:$0xff]
    %v65 = vld [vmem:[%s4 + $0xc0] sm:$0xff]
    %v66 = vld [vmem:[%s4 + $0xc8] sm:$0xff]
    %v67 = vld [vmem:[%s4 + $0xd0] sm:$0xff]
    %v68 = vld [vmem:[%s4 + $0xd8] sm:$0xff]
    %v69 = vld [vmem:[%s4 + $0xe0] sm:$0xff]
    %v70 = vld [vmem:[%s4 + $0xe8] sm:$0xff]
    %v71 = vld [vmem:[%s4 + $0xf0] sm:$0xff]
    %v72 = vld [vmem:[%s4 + $0xf8] sm:$0xff]
    %v73 = vld [vmem:[%s4 + $0x100] sm:$0xff]
    %v74 = vld [vmem:[%s4 + $0x108] sm:$0xff]
    %v75 = vld [vmem:[%s4 + $0x110] sm:$0xff]
    %v76 = vld [vmem:[%s4 + $0x118] sm:$0xff]
    %v77 = vld [vmem:[%s4 + $0x120] sm:$0xff]
    %v78 = vld [vmem:[%s4 + $0x128] sm:$0xff]
    %v79 = vld [vmem:[%s4 + $0x130] sm:$0xff]
    %v80 = vld [vmem:[%s4 + $0x138] sm:$0xff]
    %v81 = vld [vmem:[%s4 + $0x140] sm:$0xff]
    %v82 = vld [vmem:[%s4 + $0x148] sm:$0xff]
    %v83 = vld [vmem:[%s4 + $0x150] sm:$0xff]
    %v84 = vld [vmem:[%s4 + $0x158] sm:$0xff]
    %v85 = vld [vmem:[%s4 + $0x160] sm:$0xff]
    %v86 = vld [vmem:[%s4 + $0x168] sm:$0xff]
    %v87 = vld [vmem:[%s4 + $0x170] sm:$0xff]
    %v88 = vld [vmem:[%s4 + $0x178] sm:$0xff]
    %v89 = vld [vmem:[%s4 + $0x180] sm:$0xff]
    %v90 = vld [vmem:[%s4 + $0x188] sm:$0xff]
    %v91 = vld [vmem:[%s4 + $0x190] sm:$0xff]
    %v92 = vld [vmem:[%s4 + $0x198] sm:$0xff]
    %v93 = vld [vmem:[%s4 + $0x1a0] sm:$0xff]
    %v94 = vld [vmem:[%s4 + $0x1a8] sm:$0xff]
    %v95 = vld [vmem:[%s4 + $0x1b0] sm:$0xff]
    %v96 = vld [vmem:[%s4 + $0x1b8] sm:$0xff]
    %v97 = vld [vmem:[%s4 + $0x1c0] sm:$0xff]
    %v98 = vld [vmem:[%s4 + $0x1c8] sm:$0xff]
    %v99 = vld [vmem:[%s4 + $0x1d0] sm:$0xff]
    %v100 = vld [vmem:[%s4 + $0x1d8] sm:$0xff]
    %v101 = vld [vmem:[%s4 + $0x1e0] sm:$0xff]
    %v102 = vld [vmem:[%s4 + $0x1e8] sm:$0xff]
    %v103 = vld [vmem:[%s4 + $0x1f0] sm:$0xff]
    %v104 = vld [vmem:[%s4 + $0x1f8] sm:$0xff]
    %v105 = vld [vmem:[%s4 + $0x200] sm:$0xff]
    %v106 = vld [vmem:[%s4 + $0x208] sm:$0xff]
    %v107 = vld [vmem:[%s1] sm:$0xff]
    %v108 = vld [vmem:[%s1 + $0x8] sm:$0xff]
    %v109 = vld [vmem:[%s1 + $0x10] sm:$0xff]
    %v110 = vld [vmem:[%s1 + $0x18] sm:$0xff]
    %v111 = vld [vmem:[%s1 + $0x20] sm:$0xff]
    %v112 = vld [vmem:[%s1 + $0x28] sm:$0xff]
    %v113 = vld [vmem:[%s1 + $0x30] sm:$0xff]
    %v114 = vld [vmem:[%s1 + $0x38] sm:$0xff]
    %v115 = vld [vmem:[%s1 + $0x40] sm:$0xff]
    %v116 = vld [vmem:[%s1 + $0x48] sm:$0xff]
    %v117 = vld [vmem:[%s1 + $0x50] sm:$0xff]
    %v118 = vld [vmem:[%s1 + $0x58] sm:$0xff]
    %v119 = vld [vmem:[%s1 + $0x60] sm:$0xff]
    %v120 = vld [vmem:[%s1 + $0x68] sm:$0xff]
    %v121 = vld [vmem:[%s1 + $0x70] sm:$0xff]
    %v122 = vld [vmem:[%s1 + $0x78] sm:$0xff]
    %v123 = vld [vmem:[%s1 + $0x80] sm:$0xff]
    %v124 = vld [vmem:[%s1 + $0x88] sm:$0xff]
    %v125 = vld [vmem:[%s1 + $0x90] sm:$0xff]
    %v126 = vld [vmem:[%s1 + $0x98] sm:$0xff]
    %v127 = vld [vmem:[%s1 + $0xa0] sm:$0xff]
    %v128 = vld [vmem:[%s1 + $0xa8] sm:$0xff]
    %v129 = vld [vmem:[%s1 + $0xb0] sm:$0xff]
    %v130 = vld [vmem:[%s1 + $0xb8] sm:$0xff]
    %v131 = vld [vmem:[%s1 + $0xc0] sm:$0xff]
    %v132 = vld [vmem:[%s1 + $0xc8] sm:$0xff]
    %v133 = vld [vmem:[%s1 + $0xd0] sm:$0xff]
    %v134 = vld [vmem:[%s1 + $0xd8] sm:$0xff]
    %v135 = vld [vmem:[%s1 + $0xe0] sm:$0xff]
    %v136 = vld [vmem:[%s1 + $0xe8] sm:$0xff]
    %v137 = vld [vmem:[%s1 + $0xf0] sm:$0xff]
    %v138 = vld [vmem:[%s1 + $0xf8] sm:$0xff]
    %140 = vset.pattern.permute.xlu0 0
    %141 = vperm.xlu0 %140, %v41
    %v142 = vpop.permute.xlu0 %141
    %145 = vset.pattern.permute.xlu0 0
    %146 = vperm.xlu0 %145, %v42
    %v147 = vpop.permute.xlu0 %146
    %150 = vset.pattern.permute.xlu0 0
    %151 = vperm.xlu0 %150, %v43
    %v152 = vpop.permute.xlu0 %151
    %155 = vset.pattern.permute.xlu0 0
    %156 = vperm.xlu0 %155, %v44
    %v157 = vpop.permute.xlu0 %156
    %160 = vset.pattern.permute.xlu0 0
    %161 = vperm.xlu0 %160, %v45
    %v162 = vpop.permute.xlu0 %161
    %165 = vset.pattern.permute.xlu0 0
    %166 = vperm.xlu0 %165, %v46
    %v167 = vpop.permute.xlu0 %166
    %170 = vset.pattern.permute.xlu0 0
    %171 = vperm.xlu0 %170, %v47
    %v172 = vpop.permute.xlu0 %171
    %175 = vset.pattern.permute.xlu0 0
    %176 = vperm.xlu0 %175, %v48
    %v177 = vpop.permute.xlu0 %176
    %180 = vset.pattern.permute.xlu0 0
    %181 = vperm.xlu0 %180, %v49
    %v182 = vpop.permute.xlu0 %181
    %185 = vset.pattern.permute.xlu0 0
    %186 = vperm.xlu0 %185, %v50
    %v187 = vpop.permute.xlu0 %186
    %190 = vset.pattern.permute.xlu0 0
    %191 = vperm.xlu0 %190, %v51
    %v192 = vpop.permute.xlu0 %191
    %195 = vset.pattern.permute.xlu0 0
    %196 = vperm.xlu0 %195, %v52
    %v197 = vpop.permute.xlu0 %196
    %200 = vset.pattern.permute.xlu0 0
    %201 = vperm.xlu0 %200, %v53
    %v202 = vpop.permute.xlu0 %201
    %205 = vset.pattern.permute.xlu0 0
    %206 = vperm.xlu0 %205, %v54
    %v207 = vpop.permute.xlu0 %206
    %210 = vset.pattern.permute.xlu0 0
    %211 = vperm.xlu0 %210, %v55
    %v212 = vpop.permute.xlu0 %211
    %215 = vset.pattern.permute.xlu0 0
    %216 = vperm.xlu0 %215, %v56
    %v217 = vpop.permute.xlu0 %216
    %220 = vset.pattern.permute.xlu0 0
    %221 = vperm.xlu0 %220, %v57
    %v222 = vpop.permute.xlu0 %221
    %225 = vset.pattern.permute.xlu0 0
    %226 = vperm.xlu0 %225, %v58
    %v227 = vpop.permute.xlu0 %226
    %230 = vset.pattern.permute.xlu0 0
    %231 = vperm.xlu0 %230, %v59
    %v232 = vpop.permute.xlu0 %231
    %235 = vset.pattern.permute.xlu0 0
    %236 = vperm.xlu0 %235, %v60
    %v237 = vpop.permute.xlu0 %236
    %240 = vset.pattern.permute.xlu0 0
    %241 = vperm.xlu0 %240, %v61
    %v242 = vpop.permute.xlu0 %241
    %245 = vset.pattern.permute.xlu0 0
    %246 = vperm.xlu0 %245, %v62
    %v247 = vpop.permute.xlu0 %246
    %250 = vset.pattern.permute.xlu0 0
    %251 = vperm.xlu0 %250, %v63
    %v252 = vpop.permute.xlu0 %251
    %255 = vset.pattern.permute.xlu0 0
    %256 = vperm.xlu0 %255, %v64
    %v257 = vpop.permute.xlu0 %256
    %260 = vset.pattern.permute.xlu0 0
    %261 = vperm.xlu0 %260, %v65
    %v262 = vpop.permute.xlu0 %261
    %265 = vset.pattern.permute.xlu0 0
    %266 = vperm.xlu0 %265, %v66
    %v267 = vpop.permute.xlu0 %266
    %270 = vset.pattern.permute.xlu0 0
    %271 = vperm.xlu0 %270, %v67
    %v272 = vpop.permute.xlu0 %271
    %275 = vset.pattern.permute.xlu0 0
    %276 = vperm.xlu0 %275, %v68
    %v277 = vpop.permute.xlu0 %276
    %280 = vset.pattern.permute.xlu0 0
    %281 = vperm.xlu0 %280, %v69
    %v282 = vpop.permute.xlu0 %281
    %285 = vset.pattern.permute.xlu0 0
    %286 = vperm.xlu0 %285, %v70
    %v287 = vpop.permute.xlu0 %286
    %290 = vset.pattern.permute.xlu0 0
    %291 = vperm.xlu0 %290, %v71
    %v292 = vpop.permute.xlu0 %291
    %295 = vset.pattern.permute.xlu0 0
    %296 = vperm.xlu0 %295, %v72
    %v297 = vpop.permute.xlu0 %296
    %vm299 = vcmask 195584
    %v301 = vsel %vm299, %v107, 0
    %v304 = vsel %vm299, %v108, 0
    %v307 = vsel %vm299, %v109, 0
    %v310 = vsel %vm299, %v110, 0
    %v313 = vsel %vm299, %v111, 0
    %v316 = vsel %vm299, %v112, 0
    %v319 = vsel %vm299, %v113, 0
    %v322 = vsel %vm299, %v114, 0
    %v325 = vsel %vm299, %v115, 0
    %v328 = vsel %vm299, %v116, 0
    %v331 = vsel %vm299, %v117, 0
    %v334 = vsel %vm299, %v118, 0
    %v337 = vsel %vm299, %v119, 0
    %v340 = vsel %vm299, %v120, 0
    %v343 = vsel %vm299, %v121, 0
    %v346 = vsel %vm299, %v122, 0
    %v349 = vsel %vm299, %v123, 0
    %v352 = vsel %vm299, %v124, 0
    %v355 = vsel %vm299, %v125, 0
    %v358 = vsel %vm299, %v126, 0
    %v361 = vsel %vm299, %v127, 0
    %v364 = vsel %vm299, %v128, 0
    %v367 = vsel %vm299, %v129, 0
    %v370 = vsel %vm299, %v130, 0
    %v373 = vsel %vm299, %v131, 0
    %v376 = vsel %vm299, %v132, 0
    %v379 = vsel %vm299, %v133, 0
    %v382 = vsel %vm299, %v134, 0
    %v385 = vsel %vm299, %v135, 0
    %v388 = vsel %vm299, %v136, 0
    %v391 = vsel %vm299, %v137, 0
    %v394 = vsel %vm299, %v138, 0
    %396 = vmatprep.subr.mxu0 0.0
    %397 = vmatpush1.msra.mxu0 0.0
    %398 = vmatprep.subr.mxu0 0.0
    %399 = vmatpush1.msra.mxu0 0.0
    %400 = vmatprep.subr.mxu0 0.0
    %401 = vmatpush1.msra.mxu0 0.0
    %402 = vmatprep.subr.mxu0 0.0
    %403 = vmatpush1.msra.mxu0 0.0
    %404 = vmatprep.subr.mxu0 0.0
    %405 = vmatpush1.msra.mxu0 0.0
    %406 = vmatprep.subr.mxu0 0.0
    %407 = vmatpush1.msra.mxu0 0.0
    %408 = vmatprep.subr.mxu0 0.0
    %409 = vmatpush1.msra.mxu0 0.0
    %410 = vmatprep.subr.mxu0 0.0
    %411 = vmatpush1.msra.mxu0 0.0
    %412 = vmatprep.subr.mxu0 0.0
    %413 = vmatpush1.msra.mxu0 0.0
    %414 = vmatprep.subr.mxu0 0.0
    %415 = vmatpush1.msra.mxu0 0.0
    %416 = vmatprep.subr.mxu0 0.0
    %417 = vmatpush1.msra.mxu0 0.0
    %418 = vmatprep.subr.mxu0 0.0
    %419 = vmatpush1.msra.mxu0 0.0
    %420 = vmatprep.subr.mxu0 0.0
    %421 = vmatpush1.msra.mxu0 0.0
    %422 = vmatprep.subr.mxu0 0.0
    %423 = vmatpush1.msra.mxu0 %v38
    %424 = vmatprep.subr.mxu0 0.0
    %425 = vmatpush1.msra.mxu0 %v37
    %426 = vmatprep.subr.mxu0 0.0
    %427 = vmatpush1.msra.mxu0 %v36
    %428 = vmatprep.subr.mxu0 0.0
    %429 = vmatpush2.msra.mxu0 0.0
    %430 = vmatprep.subr.mxu0 0.0
    %431 = vmatpush2.msra.mxu0 0.0
    %432 = vmatprep.subr.mxu0 0.0
    %433 = vmatpush2.msra.mxu0 0.0
    %434 = vmatprep.subr.mxu0 0.0
    %435 = vmatpush2.msra.mxu0 0.0
    %436 = vmatprep.subr.mxu0 0.0
    %437 = vmatpush2.msra.mxu0 0.0
    %438 = vmatprep.subr.mxu0 0.0
    %439 = vmatpush2.msra.mxu0 0.0
    %440 = vmatprep.subr.mxu0 0.0
    %441 = vmatpush2.msra.mxu0 0.0
    %442 = vmatprep.subr.mxu0 0.0
    %443 = vmatpush2.msra.mxu0 0.0
    %444 = vmatprep.subr.mxu0 0.0
    %445 = vmatpush2.msra.mxu0 0.0
    %446 = vmatprep.subr.mxu0 0.0
    %447 = vmatpush2.msra.mxu0 0.0
    %448 = vmatprep.subr.mxu0 0.0
    %449 = vmatpush2.msra.mxu0 0.0
    %450 = vmatprep.subr.mxu0 0.0
    %451 = vmatpush2.msra.mxu0 0.0
    %452 = vmatprep.subr.mxu0 0.0
    %453 = vmatpush2.msra.mxu0 0.0
    %454 = vmatprep.subr.mxu0 0.0
    %455 = vmatpush2.msra.mxu0 0.0
    %456 = vmatprep.subr.mxu0 0.0
    %457 = vmatpush2.msra.mxu0 0.0
    %458 = vmatprep.subr.mxu0 0.0
    %459 = vmatpush2.msra.mxu0 0.0
    %460 = vmatprep.mubr.f32.mxu0 0.0
    %461 = vmatmul.mubr.f32.gmra.mxu0 %v301
    %v462 = vpop.f32.mrf.mxu0
    %v463 = vadd.f32 %v142, %v462
    %v464 = vpop.f32.mrf.mxu0
    %465 = vmatprep.mubr.f32.mxu0 0.0
    %466 = vmatmul.mubr.f32.gmra.mxu0 %v304
    %v467 = vpop.f32.mrf.mxu0
    %v468 = vadd.f32 %v147, %v467
    %v469 = vpop.f32.mrf.mxu0
    %470 = vmatprep.mubr.f32.mxu0 0.0
    %471 = vmatmul.mubr.f32.gmra.mxu0 %v307
    %v472 = vpop.f32.mrf.mxu0
    %v473 = vadd.f32 %v152, %v472
    %v474 = vpop.f32.mrf.mxu0
    %475 = vmatprep.mubr.f32.mxu0 0.0
    %476 = vmatmul.mubr.f32.gmra.mxu0 %v310
    %v477 = vpop.f32.mrf.mxu0
    %v478 = vadd.f32 %v157, %v477
    %v479 = vpop.f32.mrf.mxu0
    %480 = vmatprep.mubr.f32.mxu0 0.0
    %481 = vmatmul.mubr.f32.gmra.mxu0 %v313
    %v482 = vpop.f32.mrf.mxu0
    %v483 = vadd.f32 %v162, %v482
    %v484 = vpop.f32.mrf.mxu0
    %485 = vmatprep.mubr.f32.mxu0 0.0
    %486 = vmatmul.mubr.f32.gmra.mxu0 %v316
    %v487 = vpop.f32.mrf.mxu0
    %v488 = vadd.f32 %v167, %v487
    %v489 = vpop.f32.mrf.mxu0
    %490 = vmatprep.mubr.f32.mxu0 0.0
    %491 = vmatmul.mubr.f32.gmra.mxu0 %v319
    %v492 = vpop.f32.mrf.mxu0
    %v493 = vadd.f32 %v172, %v492
    %v494 = vpop.f32.mrf.mxu0
    %495 = vmatprep.mubr.f32.mxu0 0.0
    %496 = vmatmul.mubr.f32.gmra.mxu0 %v322
    %v497 = vpop.f32.mrf.mxu0
    %v498 = vadd.f32 %v177, %v497
    %v499 = vpop.f32.mrf.mxu0
    %500 = vmatprep.mubr.f32.mxu0 0.0
    %501 = vmatmul.mubr.f32.gmra.mxu0 %v325
    %v502 = vpop.f32.mrf.mxu0
    %v503 = vadd.f32 %v182, %v502
    %v504 = vpop.f32.mrf.mxu0
    %505 = vmatprep.mubr.f32.mxu0 0.0
    %506 = vmatmul.mubr.f32.gmra.mxu0 %v328
    %v507 = vpop.f32.mrf.mxu0
    %v508 = vadd.f32 %v187, %v507
    %v509 = vpop.f32.mrf.mxu0
    %510 = vmatprep.mubr.f32.mxu0 0.0
    %511 = vmatmul.mubr.f32.gmra.mxu0 %v331
    %v512 = vpop.f32.mrf.mxu0
    %v513 = vadd.f32 %v192, %v512
    %v514 = vpop.f32.mrf.mxu0
    %515 = vmatprep.mubr.f32.mxu0 0.0
    %516 = vmatmul.mubr.f32.gmra.mxu0 %v334
    %v517 = vpop.f32.mrf.mxu0
    %v518 = vadd.f32 %v197, %v517
    %v519 = vpop.f32.mrf.mxu0
    %520 = vmatprep.mubr.f32.mxu0 0.0
    %521 = vmatmul.mubr.f32.gmra.mxu0 %v337
    %v522 = vpop.f32.mrf.mxu0
    %v523 = vadd.f32 %v202, %v522
    %v524 = vpop.f32.mrf.mxu0
    %525 = vmatprep.mubr.f32.mxu0 0.0
    %526 = vmatmul.mubr.f32.gmra.mxu0 %v340
    %v527 = vpop.f32.mrf.mxu0
    %v528 = vadd.f32 %v207, %v527
    %v529 = vpop.f32.mrf.mxu0
    %530 = vmatprep.mubr.f32.mxu0 0.0
    %531 = vmatmul.mubr.f32.gmra.mxu0 %v343
    %v532 = vpop.f32.mrf.mxu0
    %v533 = vadd.f32 %v212, %v532
    %v534 = vpop.f32.mrf.mxu0
    %535 = vmatprep.mubr.f32.mxu0 0.0
    %536 = vmatmul.mubr.f32.gmra.mxu0 %v346
    %v537 = vpop.f32.mrf.mxu0
    %v538 = vadd.f32 %v217, %v537
    %v539 = vpop.f32.mrf.mxu0
    %540 = vmatprep.mubr.f32.mxu0 0.0
    %541 = vmatmul.mubr.f32.gmra.mxu0 %v349
    %v542 = vpop.f32.mrf.mxu0
    %v543 = vadd.f32 %v222, %v542
    %v544 = vpop.f32.mrf.mxu0
    %545 = vmatprep.mubr.f32.mxu0 0.0
    %546 = vmatmul.mubr.f32.gmra.mxu0 %v352
    %v547 = vpop.f32.mrf.mxu0
    %v548 = vadd.f32 %v227, %v547
    %v549 = vpop.f32.mrf.mxu0
    %550 = vmatprep.mubr.f32.mxu0 0.0
    %551 = vmatmul.mubr.f32.gmra.mxu0 %v355
    %v552 = vpop.f32.mrf.mxu0
    %v553 = vadd.f32 %v232, %v552
    %v554 = vpop.f32.mrf.mxu0
    %555 = vmatprep.mubr.f32.mxu0 0.0
    %556 = vmatmul.mubr.f32.gmra.mxu0 %v358
    %v557 = vpop.f32.mrf.mxu0
    %v558 = vadd.f32 %v237, %v557
    %v559 = vpop.f32.mrf.mxu0
    %560 = vmatprep.mubr.f32.mxu0 0.0
    %561 = vmatmul.mubr.f32.gmra.mxu0 %v361
    %v562 = vpop.f32.mrf.mxu0
    %v563 = vadd.f32 %v242, %v562
    %v564 = vpop.f32.mrf.mxu0
    %565 = vmatprep.mubr.f32.mxu0 0.0
    %566 = vmatmul.mubr.f32.gmra.mxu0 %v364
    %v567 = vpop.f32.mrf.mxu0
    %v568 = vadd.f32 %v247, %v567
    %v569 = vpop.f32.mrf.mxu0
    %570 = vmatprep.mubr.f32.mxu0 0.0
    %571 = vmatmul.mubr.f32.gmra.mxu0 %v367
    %v572 = vpop.f32.mrf.mxu0
    %v573 = vadd.f32 %v252, %v572
    %v574 = vpop.f32.mrf.mxu0
    %575 = vmatprep.mubr.f32.mxu0 0.0
    %576 = vmatmul.mubr.f32.gmra.mxu0 %v370
    %v577 = vpop.f32.mrf.mxu0
    %v578 = vadd.f32 %v257, %v577
    %v579 = vpop.f32.mrf.mxu0
    %580 = vmatprep.mubr.f32.mxu0 0.0
    %581 = vmatmul.mubr.f32.gmra.mxu0 %v373
    %v582 = vpop.f32.mrf.mxu0
    %v583 = vadd.f32 %v262, %v582
    %v584 = vpop.f32.mrf.mxu0
    %585 = vmatprep.mubr.f32.mxu0 0.0
    %586 = vmatmul.mubr.f32.gmra.mxu0 %v376
    %v587 = vpop.f32.mrf.mxu0
    %v588 = vadd.f32 %v267, %v587
    %v589 = vpop.f32.mrf.mxu0
    %590 = vmatprep.mubr.f32.mxu0 0.0
    %591 = vmatmul.mubr.f32.gmra.mxu0 %v379
    %v592 = vpop.f32.mrf.mxu0
    %v593 = vadd.f32 %v272, %v592
    %v594 = vpop.f32.mrf.mxu0
    %595 = vmatprep.mubr.f32.mxu0 0.0
    %596 = vmatmul.mubr.f32.gmra.mxu0 %v382
    %v597 = vpop.f32.mrf.mxu0
    %v598 = vadd.f32 %v277, %v597
    %v599 = vpop.f32.mrf.mxu0
    %600 = vmatprep.mubr.f32.mxu0 0.0
    %601 = vmatmul.mubr.f32.gmra.mxu0 %v385
    %v602 = vpop.f32.mrf.mxu0
    %v603 = vadd.f32 %v282, %v602
    %v604 = vpop.f32.mrf.mxu0
    %605 = vmatprep.mubr.f32.mxu0 0.0
    %606 = vmatmul.mubr.f32.gmra.mxu0 %v388
    %v607 = vpop.f32.mrf.mxu0
    %v608 = vadd.f32 %v287, %v607
    %v609 = vpop.f32.mrf.mxu0
    %610 = vmatprep.mubr.f32.mxu0 0.0
    %611 = vmatmul.mubr.f32.gmra.mxu0 %v391
    %v612 = vpop.f32.mrf.mxu0
    %v613 = vadd.f32 %v292, %v612
    %v614 = vpop.f32.mrf.mxu0
    %615 = vmatprep.mubr.f32.mxu0 0.0
    %616 = vmatmul.mubr.f32.gmra.mxu0 %v394
    %v617 = vpop.f32.mrf.mxu0
    %v618 = vadd.f32 %v297, %v617
    %v619 = vpop.f32.mrf.mxu0
    %620 = vdwg.mxu0
    %v621 = vmax.f32 %v463, 0.0
    %v622 = vmax.f32 %v468, 0.0
    %v623 = vmax.f32 %v473, 0.0
    %v624 = vmax.f32 %v478, 0.0
    %v625 = vmax.f32 %v483, 0.0
    %v626 = vmax.f32 %v488, 0.0
    %v627 = vmax.f32 %v493, 0.0
    %v628 = vmax.f32 %v498, 0.0
    %v629 = vmax.f32 %v503, 0.0
    %v630 = vmax.f32 %v508, 0.0
    %v631 = vmax.f32 %v513, 0.0
    %v632 = vmax.f32 %v518, 0.0
    %v633 = vmax.f32 %v523, 0.0
    %v634 = vmax.f32 %v528, 0.0
    %v635 = vmax.f32 %v533, 0.0
    %v636 = vmax.f32 %v538, 0.0
    %v637 = vmax.f32 %v543, 0.0
    %v638 = vmax.f32 %v548, 0.0
    %v639 = vmax.f32 %v553, 0.0
    %v640 = vmax.f32 %v558, 0.0
    %v641 = vmax.f32 %v563, 0.0
    %v642 = vmax.f32 %v568, 0.0
    %v643 = vmax.f32 %v573, 0.0
    %v644 = vmax.f32 %v578, 0.0
    %v645 = vmax.f32 %v583, 0.0
    %v646 = vmax.f32 %v588, 0.0
    %v647 = vmax.f32 %v593, 0.0
    %v648 = vmax.f32 %v598, 0.0
    %v649 = vmax.f32 %v603, 0.0
    %v650 = vmax.f32 %v608, 0.0
    %v651 = vmax.f32 %v613, 0.0
    %v652 = vmax.f32 %v618, 0.0
    %v653 = vld [vmem:[%s2] sm:$0xff]
    %v654 = vld [vmem:[%s2 + $0x8] sm:$0xff]
    %v655 = vld [vmem:[%s2 + $0x10] sm:$0xff]
    %v656 = vld [vmem:[%s2 + $0x18] sm:$0xff]
    %v657 = vld [vmem:[%s2 + $0x20] sm:$0xff]
    %v658 = vld [vmem:[%s2 + $0x28] sm:$0xff]
    %v659 = vld [vmem:[%s2 + $0x30] sm:$0xff]
    %v660 = vld [vmem:[%s2 + $0x38] sm:$0xff]
    %v661 = vld [vmem:[%s2 + $0x40] sm:$0xff]
    %v662 = vld [vmem:[%s2 + $0x48] sm:$0xff]
    %v663 = vld [vmem:[%s2 + $0x50] sm:$0xff]
    %v664 = vld [vmem:[%s2 + $0x58] sm:$0xff]
    %v665 = vld [vmem:[%s2 + $0x60] sm:$0xff]
    %v666 = vld [vmem:[%s2 + $0x68] sm:$0xff]
    %v667 = vld [vmem:[%s2 + $0x70] sm:$0xff]
    %v668 = vld [vmem:[%s2 + $0x78] sm:$0xff]
    %v669 = vld [vmem:[%s2 + $0x80] sm:$0xff]
    %v670 = vld [vmem:[%s2 + $0x88] sm:$0xff]
    %v671 = vld [vmem:[%s2 + $0x90] sm:$0xff]
    %v672 = vld [vmem:[%s2 + $0x98] sm:$0xff]
    %v673 = vld [vmem:[%s2 + $0xa0] sm:$0xff]
    %v674 = vld [vmem:[%s2 + $0xa8] sm:$0xff]
    %v675 = vld [vmem:[%s2 + $0xb0] sm:$0xff]
    %v676 = vld [vmem:[%s2 + $0xb8] sm:$0xff]
    %v677 = vld [vmem:[%s2 + $0xc0] sm:$0xff]
    %v678 = vld [vmem:[%s2 + $0xc8] sm:$0xff]
    %v679 = vld [vmem:[%s2 + $0xd0] sm:$0xff]
    %v680 = vld [vmem:[%s2 + $0xd8] sm:$0xff]
    %v681 = vld [vmem:[%s2 + $0xe0] sm:$0xff]
    %v682 = vld [vmem:[%s2 + $0xe8] sm:$0xff]
    %v683 = vld [vmem:[%s2 + $0xf0] sm:$0xff]
    %v684 = vld [vmem:[%s2 + $0xf8] sm:$0xff]
    %686 = vset.pattern.permute.xlu0 0
    %687 = vperm.xlu0 %686, %v73
    %v688 = vpop.permute.xlu0 %687
    %691 = vset.pattern.permute.xlu0 0
    %692 = vperm.xlu0 %691, %v74
    %v693 = vpop.permute.xlu0 %692
    %696 = vset.pattern.permute.xlu0 0
    %697 = vperm.xlu0 %696, %v75
    %v698 = vpop.permute.xlu0 %697
    %701 = vset.pattern.permute.xlu0 0
    %702 = vperm.xlu0 %701, %v76
    %v703 = vpop.permute.xlu0 %702
    %706 = vset.pattern.permute.xlu0 0
    %707 = vperm.xlu0 %706, %v77
    %v708 = vpop.permute.xlu0 %707
    %711 = vset.pattern.permute.xlu0 0
    %712 = vperm.xlu0 %711, %v78
    %v713 = vpop.permute.xlu0 %712
    %716 = vset.pattern.permute.xlu0 0
    %717 = vperm.xlu0 %716, %v79
    %v718 = vpop.permute.xlu0 %717
    %721 = vset.pattern.permute.xlu0 0
    %722 = vperm.xlu0 %721, %v80
    %v723 = vpop.permute.xlu0 %722
    %726 = vset.pattern.permute.xlu0 0
    %727 = vperm.xlu0 %726, %v81
    %v728 = vpop.permute.xlu0 %727
    %731 = vset.pattern.permute.xlu0 0
    %732 = vperm.xlu0 %731, %v82
    %v733 = vpop.permute.xlu0 %732
    %736 = vset.pattern.permute.xlu0 0
    %737 = vperm.xlu0 %736, %v83
    %v738 = vpop.permute.xlu0 %737
    %741 = vset.pattern.permute.xlu0 0
    %742 = vperm.xlu0 %741, %v84
    %v743 = vpop.permute.xlu0 %742
    %746 = vset.pattern.permute.xlu0 0
    %747 = vperm.xlu0 %746, %v85
    %v748 = vpop.permute.xlu0 %747
    %751 = vset.pattern.permute.xlu0 0
    %752 = vperm.xlu0 %751, %v86
    %v753 = vpop.permute.xlu0 %752
    %756 = vset.pattern.permute.xlu0 0
    %757 = vperm.xlu0 %756, %v87
    %v758 = vpop.permute.xlu0 %757
    %761 = vset.pattern.permute.xlu0 0
    %762 = vperm.xlu0 %761, %v88
    %v763 = vpop.permute.xlu0 %762
    %765 = vmatprep.subr.mxu0 0.0
    %766 = vmatpush1.msra.mxu0 %v636
    %767 = vmatprep.subr.mxu0 0.0
    %768 = vmatpush1.msra.mxu0 %v635
    %769 = vmatprep.subr.mxu0 0.0
    %770 = vmatpush1.msra.mxu0 %v634
    %771 = vmatprep.subr.mxu0 0.0
    %772 = vmatpush1.msra.mxu0 %v633
    %773 = vmatprep.subr.mxu0 0.0
    %774 = vmatpush1.msra.mxu0 %v632
    %775 = vmatprep.subr.mxu0 0.0
    %776 = vmatpush1.msra.mxu0 %v631
    %777 = vmatprep.subr.mxu0 0.0
    %778 = vmatpush1.msra.mxu0 %v630
    %779 = vmatprep.subr.mxu0 0.0
    %780 = vmatpush1.msra.mxu0 %v629
    %781 = vmatprep.subr.mxu0 0.0
    %782 = vmatpush1.msra.mxu0 %v628
    %783 = vmatprep.subr.mxu0 0.0
    %784 = vmatpush1.msra.mxu0 %v627
    %785 = vmatprep.subr.mxu0 0.0
    %786 = vmatpush1.msra.mxu0 %v626
    %787 = vmatprep.subr.mxu0 0.0
    %788 = vmatpush1.msra.mxu0 %v625
    %789 = vmatprep.subr.mxu0 0.0
    %790 = vmatpush1.msra.mxu0 %v624
    %791 = vmatprep.subr.mxu0 0.0
    %792 = vmatpush1.msra.mxu0 %v623
    %793 = vmatprep.subr.mxu0 0.0
    %794 = vmatpush1.msra.mxu0 %v622
    %795 = vmatprep.subr.mxu0 0.0
    %796 = vmatpush1.msra.mxu0 %v621
    %797 = vmatprep.subr.mxu0 0.0
    %798 = vmatpush2.msra.mxu0 %v652
    %799 = vmatprep.subr.mxu0 0.0
    %800 = vmatpush2.msra.mxu0 %v651
    %801 = vmatprep.subr.mxu0 0.0
    %802 = vmatpush2.msra.mxu0 %v650
    %803 = vmatprep.subr.mxu0 0.0
    %804 = vmatpush2.msra.mxu0 %v649
    %805 = vmatprep.subr.mxu0 0.0
    %806 = vmatpush2.msra.mxu0 %v648
    %807 = vmatprep.subr.mxu0 0.0
    %808 = vmatpush2.msra.mxu0 %v647
    %809 = vmatprep.subr.mxu0 0.0
    %810 = vmatpush2.msra.mxu0 %v646
    %811 = vmatprep.subr.mxu0 0.0
    %812 = vmatpush2.msra.mxu0 %v645
    %813 = vmatprep.subr.mxu0 0.0
    %814 = vmatpush2.msra.mxu0 %v644
    %815 = vmatprep.subr.mxu0 0.0
    %816 = vmatpush2.msra.mxu0 %v643
    %817 = vmatprep.subr.mxu0 0.0
    %818 = vmatpush2.msra.mxu0 %v642
    %819 = vmatprep.subr.mxu0 0.0
    %820 = vmatpush2.msra.mxu0 %v641
    %821 = vmatprep.subr.mxu0 0.0
    %822 = vmatpush2.msra.mxu0 %v640
    %823 = vmatprep.subr.mxu0 0.0
    %824 = vmatpush2.msra.mxu0 %v639
    %825 = vmatprep.subr.mxu0 0.0
    %826 = vmatpush2.msra.mxu0 %v638
    %827 = vmatprep.subr.mxu0 0.0
    %828 = vmatpush2.msra.mxu0 %v637
    %829 = vmatprep.mubr.f32.mxu0 %v654
    %830 = vmatmul.mubr.f32.gmra.mxu0 %v653
    %v831 = vpop.f32.mrf.mxu0
    %v832 = vadd.f32 %v688, %v831
    %v833 = vpop.f32.mrf.mxu0
    %834 = vmatprep.mubr.f32.mxu0 %v656
    %835 = vmatmul.mubr.f32.gmra.mxu0 %v655
    %v836 = vpop.f32.mrf.mxu0
    %v837 = vadd.f32 %v693, %v836
    %v838 = vpop.f32.mrf.mxu0
    %839 = vmatprep.mubr.f32.mxu0 %v658
    %840 = vmatmul.mubr.f32.gmra.mxu0 %v657
    %v841 = vpop.f32.mrf.mxu0
    %v842 = vadd.f32 %v698, %v841
    %v843 = vpop.f32.mrf.mxu0
    %844 = vmatprep.mubr.f32.mxu0 %v660
    %845 = vmatmul.mubr.f32.gmra.mxu0 %v659
    %v846 = vpop.f32.mrf.mxu0
    %v847 = vadd.f32 %v703, %v846
    %v848 = vpop.f32.mrf.mxu0
    %849 = vmatprep.mubr.f32.mxu0 %v662
    %850 = vmatmul.mubr.f32.gmra.mxu0 %v661
    %v851 = vpop.f32.mrf.mxu0
    %v852 = vadd.f32 %v708, %v851
    %v853 = vpop.f32.mrf.mxu0
    %854 = vmatprep.mubr.f32.mxu0 %v664
    %855 = vmatmul.mubr.f32.gmra.mxu0 %v663
    %v856 = vpop.f32.mrf.mxu0
    %v857 = vadd.f32 %v713, %v856
    %v858 = vpop.f32.mrf.mxu0
    %859 = vmatprep.mubr.f32.mxu0 %v666
    %860 = vmatmul.mubr.f32.gmra.mxu0 %v665
    %v861 = vpop.f32.mrf.mxu0
    %v862 = vadd.f32 %v718, %v861
    %v863 = vpop.f32.mrf.mxu0
    %864 = vmatprep.mubr.f32.mxu0 %v668
    %865 = vmatmul.mubr.f32.gmra.mxu0 %v667
    %v866 = vpop.f32.mrf.mxu0
    %v867 = vadd.f32 %v723, %v866
    %v868 = vpop.f32.mrf.mxu0
    %869 = vmatprep.mubr.f32.mxu0 %v670
    %870 = vmatmul.mubr.f32.gmra.mxu0 %v669
    %v871 = vpop.f32.mrf.mxu0
    %v872 = vadd.f32 %v728, %v871
    %v873 = vpop.f32.mrf.mxu0
    %874 = vmatprep.mubr.f32.mxu0 %v672
    %875 = vmatmul.mubr.f32.gmra.mxu0 %v671
    %v876 = vpop.f32.mrf.mxu0
    %v877 = vadd.f32 %v733, %v876
    %v878 = vpop.f32.mrf.mxu0
    %879 = vmatprep.mubr.f32.mxu0 %v674
    %880 = vmatmul.mubr.f32.gmra.mxu0 %v673
    %v881 = vpop.f32.mrf.mxu0
    %v882 = vadd.f32 %v738, %v881
    %v883 = vpop.f32.mrf.mxu0
    %884 = vmatprep.mubr.f32.mxu0 %v676
    %885 = vmatmul.mubr.f32.gmra.mxu0 %v675
    %v886 = vpop.f32.mrf.mxu0
    %v887 = vadd.f32 %v743, %v886
    %v888 = vpop.f32.mrf.mxu0
    %889 = vmatprep.mubr.f32.mxu0 %v678
    %890 = vmatmul.mubr.f32.gmra.mxu0 %v677
    %v891 = vpop.f32.mrf.mxu0
    %v892 = vadd.f32 %v748, %v891
    %v893 = vpop.f32.mrf.mxu0
    %894 = vmatprep.mubr.f32.mxu0 %v680
    %895 = vmatmul.mubr.f32.gmra.mxu0 %v679
    %v896 = vpop.f32.mrf.mxu0
    %v897 = vadd.f32 %v753, %v896
    %v898 = vpop.f32.mrf.mxu0
    %899 = vmatprep.mubr.f32.mxu0 %v682
    %900 = vmatmul.mubr.f32.gmra.mxu0 %v681
    %v901 = vpop.f32.mrf.mxu0
    %v902 = vadd.f32 %v758, %v901
    %v903 = vpop.f32.mrf.mxu0
    %904 = vmatprep.mubr.f32.mxu0 %v684
    %905 = vmatmul.mubr.f32.gmra.mxu0 %v683
    %v906 = vpop.f32.mrf.mxu0
    %v907 = vadd.f32 %v763, %v906
    %v908 = vpop.f32.mrf.mxu0
    %909 = vdwg.mxu0
    %v910 = vmax.f32 %v832, 0.0
    %v911 = vmax.f32 %v837, 0.0
    %v912 = vmax.f32 %v842, 0.0
    %v913 = vmax.f32 %v847, 0.0
    %v914 = vmax.f32 %v852, 0.0
    %v915 = vmax.f32 %v857, 0.0
    %v916 = vmax.f32 %v862, 0.0
    %v917 = vmax.f32 %v867, 0.0
    %v918 = vmax.f32 %v872, 0.0
    %v919 = vmax.f32 %v877, 0.0
    %v920 = vmax.f32 %v882, 0.0
    %v921 = vmax.f32 %v887, 0.0
    %v922 = vmax.f32 %v892, 0.0
    %v923 = vmax.f32 %v897, 0.0
    %v924 = vmax.f32 %v902, 0.0
    %v925 = vmax.f32 %v907, 0.0
    %v926 = vld [vmem:[%s3] sm:$0xff]
    %v927 = vld [vmem:[%s3 + $0x8] sm:$0xff]
    %v928 = vld [vmem:[%s3 + $0x10] sm:$0xff]
    %v929 = vld [vmem:[%s3 + $0x18] sm:$0xff]
    %v930 = vld [vmem:[%s3 + $0x20] sm:$0xff]
    %v931 = vld [vmem:[%s3 + $0x28] sm:$0xff]
    %v932 = vld [vmem:[%s3 + $0x30] sm:$0xff]
    %v933 = vld [vmem:[%s3 + $0x38] sm:$0xff]
    %935 = vset.pattern.permute.xlu0 0
    %936 = vperm.xlu0 %935, %v89
    %v937 = vpop.permute.xlu0 %936
    %940 = vset.pattern.permute.xlu0 0
    %941 = vperm.xlu0 %940, %v90
    %v942 = vpop.permute.xlu0 %941
    %945 = vset.pattern.permute.xlu0 0
    %946 = vperm.xlu0 %945, %v91
    %v947 = vpop.permute.xlu0 %946
    %950 = vset.pattern.permute.xlu0 0
    %951 = vperm.xlu0 %950, %v92
    %v952 = vpop.permute.xlu0 %951
    %955 = vset.pattern.permute.xlu0 0
    %956 = vperm.xlu0 %955, %v93
    %v957 = vpop.permute.xlu0 %956
    %960 = vset.pattern.permute.xlu0 0
    %961 = vperm.xlu0 %960, %v94
    %v962 = vpop.permute.xlu0 %961
    %965 = vset.pattern.permute.xlu0 0
    %966 = vperm.xlu0 %965, %v95
    %v967 = vpop.permute.xlu0 %966
    %970 = vset.pattern.permute.xlu0 0
    %971 = vperm.xlu0 %970, %v96
    %v972 = vpop.permute.xlu0 %971
    %974 = vmatprep.subr.mxu0 0.0
    %975 = vmatpush1.msra.mxu0 %v925
    %976 = vmatprep.subr.mxu0 0.0
    %977 = vmatpush1.msra.mxu0 %v924
    %978 = vmatprep.subr.mxu0 0.0
    %979 = vmatpush1.msra.mxu0 %v923
    %980 = vmatprep.subr.mxu0 0.0
    %981 = vmatpush1.msra.mxu0 %v922
    %982 = vmatprep.subr.mxu0 0.0
    %983 = vmatpush1.msra.mxu0 %v921
    %984 = vmatprep.subr.mxu0 0.0
    %985 = vmatpush1.msra.mxu0 %v920
    %986 = vmatprep.subr.mxu0 0.0
    %987 = vmatpush1.msra.mxu0 %v919
    %988 = vmatprep.subr.mxu0 0.0
    %989 = vmatpush1.msra.mxu0 %v918
    %990 = vmatprep.subr.mxu0 0.0
    %991 = vmatpush1.msra.mxu0 %v917
    %992 = vmatprep.subr.mxu0 0.0
    %993 = vmatpush1.msra.mxu0 %v916
    %994 = vmatprep.subr.mxu0 0.0
    %995 = vmatpush1.msra.mxu0 %v915
    %996 = vmatprep.subr.mxu0 0.0
    %997 = vmatpush1.msra.mxu0 %v914
    %998 = vmatprep.subr.mxu0 0.0
    %999 = vmatpush1.msra.mxu0 %v913
    %1000 = vmatprep.subr.mxu0 0.0
    %1001 = vmatpush1.msra.mxu0 %v912
    %1002 = vmatprep.subr.mxu0 0.0
    %1003 = vmatpush1.msra.mxu0 %v911
    %1004 = vmatprep.subr.mxu0 0.0
    %1005 = vmatpush1.msra.mxu0 %v910
    %1006 = vmatprep.subr.mxu0 0.0
    %1007 = vmatpush2.msra.mxu0 0.0
    %1008 = vmatprep.subr.mxu0 0.0
    %1009 = vmatpush2.msra.mxu0 0.0
    %1010 = vmatprep.subr.mxu0 0.0
    %1011 = vmatpush2.msra.mxu0 0.0
    %1012 = vmatprep.subr.mxu0 0.0
    %1013 = vmatpush2.msra.mxu0 0.0
    %1014 = vmatprep.subr.mxu0 0.0
    %1015 = vmatpush2.msra.mxu0 0.0
    %1016 = vmatprep.subr.mxu0 0.0
    %1017 = vmatpush2.msra.mxu0 0.0
    %1018 = vmatprep.subr.mxu0 0.0
    %1019 = vmatpush2.msra.mxu0 0.0
    %1020 = vmatprep.subr.mxu0 0.0
    %1021 = vmatpush2.msra.mxu0 0.0
    %1022 = vmatprep.subr.mxu0 0.0
    %1023 = vmatpush2.msra.mxu0 0.0
    %1024 = vmatprep.subr.mxu0 0.0
    %1025 = vmatpush2.msra.mxu0 0.0
    %1026 = vmatprep.subr.mxu0 0.0
    %1027 = vmatpush2.msra.mxu0 0.0
    %1028 = vmatprep.subr.mxu0 0.0
    %1029 = vmatpush2.msra.mxu0 0.0
    %1030 = vmatprep.subr.mxu0 0.0
    %1031 = vmatpush2.msra.mxu0 0.0
    %1032 = vmatprep.subr.mxu0 0.0
    %1033 = vmatpush2.msra.mxu0 0.0
    %1034 = vmatprep.subr.mxu0 0.0
    %1035 = vmatpush2.msra.mxu0 0.0
    %1036 = vmatprep.subr.mxu0 0.0
    %1037 = vmatpush2.msra.mxu0 0.0
    %1038 = vmatprep.mubr.f32.mxu0 0.0
    %1039 = vmatmul.mubr.f32.gmra.mxu0 %v926
    %v1040 = vpop.f32.mrf.mxu0
    %v1041 = vadd.f32 %v937, %v1040
    %v1042 = vpop.f32.mrf.mxu0
    %1043 = vmatprep.mubr.f32.mxu0 0.0
    %1044 = vmatmul.mubr.f32.gmra.mxu0 %v927
    %v1045 = vpop.f32.mrf.mxu0
    %v1046 = vadd.f32 %v942, %v1045
    %v1047 = vpop.f32.mrf.mxu0
    %1048 = vmatprep.mubr.f32.mxu0 0.0
    %1049 = vmatmul.mubr.f32.gmra.mxu0 %v928
    %v1050 = vpop.f32.mrf.mxu0
    %v1051 = vadd.f32 %v947, %v1050
    %v1052 = vpop.f32.mrf.mxu0
    %1053 = vmatprep.mubr.f32.mxu0 0.0
    %1054 = vmatmul.mubr.f32.gmra.mxu0 %v929
    %v1055 = vpop.f32.mrf.mxu0
    %v1056 = vadd.f32 %v952, %v1055
    %v1057 = vpop.f32.mrf.mxu0
    %1058 = vmatprep.mubr.f32.mxu0 0.0
    %1059 = vmatmul.mubr.f32.gmra.mxu0 %v930
    %v1060 = vpop.f32.mrf.mxu0
    %v1061 = vadd.f32 %v957, %v1060
    %v1062 = vpop.f32.mrf.mxu0
    %1063 = vmatprep.mubr.f32.mxu0 0.0
    %1064 = vmatmul.mubr.f32.gmra.mxu0 %v931
    %v1065 = vpop.f32.mrf.mxu0
    %v1066 = vadd.f32 %v962, %v1065
    %v1067 = vpop.f32.mrf.mxu0
    %1068 = vmatprep.mubr.f32.mxu0 0.0
    %1069 = vmatmul.mubr.f32.gmra.mxu0 %v932
    %v1070 = vpop.f32.mrf.mxu0
    %v1071 = vadd.f32 %v967, %v1070
    %v1072 = vpop.f32.mrf.mxu0
    %1073 = vmatprep.mubr.f32.mxu0 0.0
    %1074 = vmatmul.mubr.f32.gmra.mxu0 %v933
    %v1075 = vpop.f32.mrf.mxu0
    %v1076 = vadd.f32 %v972, %v1075
    %v1077 = vpop.f32.mrf.mxu0
    %1078 = vdwg.mxu0
    %v1079 = vmax.f32 %v1041, 0.0
    %v1080 = vmax.f32 %v1046, 0.0
    %v1081 = vmax.f32 %v1051, 0.0
    %v1082 = vmax.f32 %v1056, 0.0
    %v1083 = vmax.f32 %v1061, 0.0
    %v1084 = vmax.f32 %v1066, 0.0
    %v1085 = vmax.f32 %v1071, 0.0
    %v1086 = vmax.f32 %v1076, 0.0
    %1088 = vset.pattern.permute.xlu0 0
    %1089 = vperm.xlu0 %1088, %v97
    %v1090 = vpop.permute.xlu0 %1089
    %1093 = vset.pattern.permute.xlu0 0
    %1094 = vperm.xlu0 %1093, %v98
    %v1095 = vpop.permute.xlu0 %1094
    %1098 = vset.pattern.permute.xlu0 0
    %1099 = vperm.xlu0 %1098, %v99
    %v1100 = vpop.permute.xlu0 %1099
    %1103 = vset.pattern.permute.xlu0 0
    %1104 = vperm.xlu0 %1103, %v100
    %v1105 = vpop.permute.xlu0 %1104
    %1108 = vset.pattern.permute.xlu0 0
    %1109 = vperm.xlu0 %1108, %v101
    %v1110 = vpop.permute.xlu0 %1109
    %1113 = vset.pattern.permute.xlu0 0
    %1114 = vperm.xlu0 %1113, %v102
    %v1115 = vpop.permute.xlu0 %1114
    %1118 = vset.pattern.permute.xlu0 0
    %1119 = vperm.xlu0 %1118, %v103
    %v1120 = vpop.permute.xlu0 %1119
    %1123 = vset.pattern.permute.xlu0 0
    %1124 = vperm.xlu0 %1123, %v104
    %v1125 = vpop.permute.xlu0 %1124
    %v1127 = vmul.f32 %v1079, %v1090
    %v1128 = vmul.f32 %v1080, %v1095
    %v1129 = vmul.f32 %v1081, %v1100
    %v1130 = vmul.f32 %v1082, %v1105
    %v1131 = vmul.f32 %v1083, %v1110
    %v1132 = vmul.f32 %v1084, %v1115
    %v1133 = vmul.f32 %v1085, %v1120
    %v1134 = vmul.f32 %v1086, %v1125
    %v1135 = vadd.f32 %v1127, %v1128
    %v1136 = vadd.f32 %v1135, %v1129
    %v1137 = vadd.f32 %v1136, %v1130
    %v1138 = vadd.f32 %v1137, %v1131
    %v1139 = vadd.f32 %v1138, %v1132
    %v1140 = vadd.f32 %v1139, %v1133
    %v1141 = vadd.f32 %v1140, %v1134
    %v1142 = vrot.slane %v1141, 4
    %v1143 = vadd.f32 %v1141, %v1142
    %v1144 = vrot.slane %v1143, 2
    %v1145 = vadd.f32 %v1143, %v1144
    %v1146 = vrot.slane %v1145, 1
    %v1147 = vadd.f32 %v1145, %v1146
    %s1148 = sld [smem:[#allocation2]]
    %v1149 = vstv %s1148
    %v1150 = vadd.f32 %v1147, %v1149
    %v1151 = vmax.f32 %v1150, 0.0
    %1153 = vset.pattern.permute.xlu0 0
    %1154 = vperm.xlu0 %1153, %v105
    %v1155 = vpop.permute.xlu0 %1154
    %1158 = vset.pattern.permute.xlu0 0
    %1159 = vperm.xlu0 %1158, %v106
    %v1160 = vpop.permute.xlu0 %1159
    %v1162 = vmul.f32 %v39, %v1155
    %v1163 = vmul.f32 %v40, %v1160
    %v1164 = vadd.f32 %v1162, %v1163
    %v1165 = vrot.slane %v1164, 4
    %v1166 = vadd.f32 %v1164, %v1165
    %v1167 = vrot.slane %v1166, 2
    %v1168 = vadd.f32 %v1166, %v1167
    %v1169 = vrot.slane %v1168, 1
    %v1170 = vadd.f32 %v1168, %v1169
    %s1171 = sld [smem:[#allocation2 + $0x1]]
    %v1172 = vstv %s1171
    %v1173 = vadd.f32 %v1170, %v1172
    %s1174 = sld [smem:[#allocation2 + $0x2]]
    %v1175 = vstv %s1174
    %v1176 = vmul.f32 %v1175, %v1173
    %s1177 = ssub.f32 1.0, %s1174
    %v1178 = vstv %s1177
    %v1179 = vmul.f32 %v1178, %v1151
    %v1180 = vadd.f32 %v1176, %v1179
    %v1181 = vxor.u32 %v1180, 2147483648
    %v1182 = vmul.f32 %v1181, 1.442695
    %v1183 = vpow.pop %v1182
    %v1184 = vadd.f32 %v1183, 1.0
    %v1185 = vrcp.pop %v1184
    %v1186 = vmul.f32 1.0, %v1185
    %1187 = vst [vmem:[%s6] sm:$0x1] %v1186
    // Predicated region
    $region30: #{wide_deep_forward.1} parent=1 // pred_check
      _
    $region31: #{wide_deep_forward.1} parent=1 // pred_check_branch
      %1189 = sbr.rel (0) target = $region33
    $region32: #{wide_deep_forward.1} parent=1 // pred_region
      _
    $region33: #{wide_deep_forward.1} parent=1 // pred_fallthru
      _
    // Predicated region
    $region34: #{wide_deep_forward.1} parent=1 // pred_check
      _
    $region35: #{wide_deep_forward.1} parent=1 // pred_check_branch
      %1191 = sbr.rel (0) target = $region37
    $region36: #{wide_deep_forward.1} parent=1 // pred_region
      _
    $region37: #{wide_deep_forward.1} parent=1 // pred_fallthru
      _
    %1192 = vsyncpa [#allocation3], 1

</llo_original>
